<compile_context>
chip_gen: v7x
topology: tpu7x:2x2x1
jax: 0.10.0
libtpu: 0.0.40
codegen_flags: <defaults>
</compile_context>

<pallas_src>
import jax
import jax.numpy as jnp
from jax.experimental import pallas as pl
from jax.experimental.pallas import tpu as pltpu

_LANES = 128
_SUBLANES = 8


def _softshrink_kernel(t_ref, x_ref, o_ref):
    # t_ref: SMEM (1,) scalar threshold (f32)
    # x_ref / o_ref: VMEM tiles [tile_rows, 128]
    x = x_ref[...]
    t = t_ref[0].astype(x.dtype)
    # S_t(x) = x - clamp(x, -t, t)
    o_ref[...] = x - jnp.minimum(jnp.maximum(x, -t), t)


def soft_shrink_act(x, threshold, *, tile_rows=4096):
    """Applies S_t(x) = ReLU(x - t) - ReLU(-x - t) elementwise.

    x: any-shape array (e.g. NCHW). threshold: scalar (python/0-d array).
    """
    orig_shape = x.shape
    total = x.size

    # Fallback for shapes that don't flatten to whole (8,128) vregs — avoids
    # any pad/slice HBM round-trips for the common aligned case below.
    if total == 0 or total % (_SUBLANES * _LANES) != 0:
        t = jnp.asarray(threshold, dtype=x.dtype)
        return x - jnp.minimum(jnp.maximum(x, -t), t)

    rows = total // _LANES                      # multiple of 8 by construction
    x2d = x.reshape(rows, _LANES)               # metadata-only reshape

    # Large streaming tile, clipped to the actual number of rows.
    tile = max(_SUBLANES, (int(tile_rows) // _SUBLANES) * _SUBLANES)
    tile = min(tile, rows)
    grid_rows = pl.cdiv(rows, tile)             # ragged last tile handled by Pallas

    t_arr = jnp.asarray(threshold, dtype=jnp.float32).reshape(1)

    out2d = pl.pallas_call(
        _softshrink_kernel,
        out_shape=jax.ShapeDtypeStruct(x2d.shape, x.dtype),
        grid=(grid_rows,),
        in_specs=[
            pl.BlockSpec(memory_space=pltpu.SMEM),            # threshold scalar
            pl.BlockSpec((tile, _LANES), lambda i: (i, 0)),   # x tile
        ],
        out_specs=pl.BlockSpec((tile, _LANES), lambda i: (i, 0)),
        compiler_params=pltpu.CompilerParams(
            dimension_semantics=("parallel",),
        ),
    )(t_arr, x2d)

    return out2d.reshape(orig_shape)


if __name__ == "__main__":
    key = jax.random.PRNGKey(0)
    # Small NCHW input consistent with a conv-net activation: [2, 4, 16, 16]
    x = jax.random.normal(key, (2, 4, 16, 16), dtype=jnp.float32)
    threshold = 0.5

    out = soft_shrink_act(x, threshold)
    out = jax.block_until_ready(out)

    # Reference check (plain JAX, original ReLU formulation)
    ref = jnp.maximum(x - threshold, 0.0) - jnp.maximum(-x - threshold, 0.0)
    assert out.shape == x.shape and out.dtype == x.dtype
    assert jnp.allclose(out, ref, atol=1e-6), "mismatch vs reference"

    print("KERNEL_OK")
</pallas_src>

<mosaic_0001>
module attributes {stable_mosaic.version = 11 : i64} {
  func.func @_softshrink_kernel(%arg0: i32, %arg1: memref<1xf32, #tpu.memory_space<smem>>, %arg2: memref<16x128xf32, #tpu.memory_space<vmem>>, %arg3: memref<16x128xf32, #tpu.memory_space<vmem>>) attributes {dimension_semantics = [#tpu.dimension_semantics<parallel>], iteration_bounds = array<i64: 1>, scalar_prefetch = 0 : i64, scratch_operands = 0 : i64, tpu.core_type = #tpu.core_type<tc>, window_params = [{transform_indices = @transform_0, window_bounds = array<i64: 1>}, {transform_indices = @transform_1, window_bounds = array<i64: 16, 128>}, {transform_indices = @transform_2, window_bounds = array<i64: 16, 128>}]} {
    %c0 = arith.constant 0 : index
    %c0_0 = arith.constant 0 : index
    %0 = vector.load %arg2[%c0, %c0_0] : memref<16x128xf32, #tpu.memory_space<vmem>>, vector<16x128xf32>
    %c0_1 = arith.constant 0 : index
    %1 = memref.load %arg1[%c0_1] : memref<1xf32, #tpu.memory_space<smem>>
    %cst = arith.constant 0.000000e+00 : f32
    %2 = arith.subf %cst, %1 : f32
    %3 = vector.broadcast %2 : f32 to vector<16x128xf32>
    %4 = arith.maximumf %0, %3 : vector<16x128xf32>
    %5 = vector.broadcast %1 : f32 to vector<16x128xf32>
    %6 = arith.minimumf %4, %5 : vector<16x128xf32>
    %7 = arith.subf %0, %6 : vector<16x128xf32>
    %c0_2 = arith.constant 0 : index
    %c0_3 = arith.constant 0 : index
    %8 = vector.load %arg3[%c0_2, %c0_3] : memref<16x128xf32, #tpu.memory_space<vmem>>, vector<16x128xf32>
    tpu.vector_store %arg3[%c0_2, %c0_3], %7 {strides = array<i32>} : memref<16x128xf32, #tpu.memory_space<vmem>>, vector<16x128xf32>,
    return
  }
  func.func @transform_0(%arg0: i32) -> i32 {
    %c0_i32 = arith.constant 0 : i32
    %c0_i32_0 = arith.constant 0 : i32
    return %c0_i32 : i32
  }
  func.func @transform_1(%arg0: i32) -> (i32, i32) {
    %c0_i32 = arith.constant 0 : i32
    %c0_i32_0 = arith.constant 0 : i32
    return %arg0, %c0_i32 : i32, i32
  }
  func.func @transform_2(%arg0: i32) -> (i32, i32) {
    %c0_i32 = arith.constant 0 : i32
    %c0_i32_0 = arith.constant 0 : i32
    return %arg0, %c0_i32 : i32, i32
  }
}

</mosaic_0001>

<llo_original>
// kernel: tpu_custom_call.1
$region0: #{tpu_custom_call.1}
  #allocation0 [shape = 'u32[]', space=smem, size = 0x4, offset = 0x4, fixed_abs, tag = 'smem constant byte address 0x4 - core index']
  #allocation1 [shape = 'u32[144,128]{1,0:T(1,128)}', space=vmem, size = 0x12000, scoped, tag = 'internal scratch']
  #allocation2 [shape = 'f32[1]{0:T(128)S(6)}', space=smem, size = 0x200, scoped, tag = 'scoped memory for tpu_custom_call.1']
  %s0 = inlined_call_operand.<no memory space> [shape: f32[1], index: 0, kind: input, shape index: {}]
  %s1 = inlined_call_operand.hbm [shape: f32[16,128], index: 1, kind: input, shape index: {}]
  %s2 = inlined_call_operand.hbm [shape: f32[16,128], index: 2, kind: output, shape index: {}]
  %s3 = sld [smem:[#allocation0]]
  $region22: #{tpu_custom_call.1} parent=0
    _
  %s5 = ssub.s32 1, %s3
  %s6 = scalar_select 0, %s5, %s3
  %7 = sst [smem:[#allocation2]] %s0
  $region1: #{tpu_custom_call.1} parent=0
    #allocation3 [shape = 'u8[8192]{0}', space=vmem, size = 0x2000, scoped, tag = 'input window, operand 1, single buffered']
    #allocation4 [shape = 's32[1]{0}', space=sflag, size = 0x4, scoped, tag = 'scoped memory for tpu_custom_call.1']
    #allocation5 [shape = 's32[1]{0}', space=sflag, size = 0x4, scoped, tag = 'scoped memory for tpu_custom_call.1']
    #allocation6 [shape = 'u8[8192]{0}', space=vmem, size = 0x2000, scoped, tag = 'output window, operand 0, single buffered']
    %8 = vsyncpa [#allocation4], 0
    %9 = vsyncpa [#allocation5], 0
    // Predicated region
    $region2: #{tpu_custom_call.1} parent=1 // pred_check
      _
    $region3: #{tpu_custom_call.1} parent=1 // pred_check_branch
      %11 = sbr.rel (0) target = $region5
    $region4: #{tpu_custom_call.1} parent=1 // pred_region
      _
    $region5: #{tpu_custom_call.1} parent=1 // pred_fallthru
      _
    // Predicated region
    $region6: #{tpu_custom_call.1} parent=1 // pred_check
      _
    $region7: #{tpu_custom_call.1} parent=1 // pred_check_branch
      %13 = sbr.rel (0) target = $region9
    $region8: #{tpu_custom_call.1} parent=1 // pred_region
      %s15 = ssub.s32 256, 256
      %16 = vsyncadd [#allocation4], %s15
      %s17 = sshll.u32 [#allocation3], 4
      %s18 = int_to_ptr.vmem [resolvable:$true] %s17
      %23 = dma.hbm_to_vmem [thread:$0]  %s1, 256, %s18, [#allocation4], 128, 128, 8
    $region9: #{tpu_custom_call.1} parent=1 // pred_fallthru
      _
    // Predicated region
    $region10: #{tpu_custom_call.1} parent=1 // pred_check
      _
    $region11: #{tpu_custom_call.1} parent=1 // pred_check_branch
      %25 = sbr.rel (0) target = $region13
    $region12: #{tpu_custom_call.1} parent=1 // pred_region
      %26 = dma.done [#allocation4], 256
    $region13: #{tpu_custom_call.1} parent=1 // pred_fallthru
      _
    %v27 = vld [vmem:[#allocation3] sm:$0xff]
    %v28 = vld [vmem:[#allocation3 + $0x8] sm:$0xff]
    %s29 = sld [smem:[#allocation2]]
    %s30 = ssub.f32 0.0, %s29
    %v31 = vstv %s30
    %v32 = vmax.f32 %v27, %v31
    %v33 = vmax.f32 %v28, %v31
    %v34 = vstv %s29
    %v35 = vmin.f32 %v32, %v34
    %v36 = vmin.f32 %v33, %v34
    %v37 = vsub.f32 %v27, %v35
    %v38 = vsub.f32 %v28, %v36
    %39 = vst [vmem:[#allocation6] sm:$0xff] %v37
    %40 = vst [vmem:[#allocation6 + $0x8] sm:$0xff] %v38
    // Predicated region
    $region14: #{tpu_custom_call.1} parent=1 // pred_check
      _
    $region15: #{tpu_custom_call.1} parent=1 // pred_check_branch
      %42 = sbr.rel (0) target = $region17
    $region16: #{tpu_custom_call.1} parent=1 // pred_region
      %s44 = ssub.s32 256, 256
      %45 = vsyncadd [#allocation5], %s44
      %s46 = sshll.u32 [#allocation6], 4
      %s47 = int_to_ptr.vmem [resolvable:$true] %s46
      %52 = dma.vmem_to_hbm [thread:$0]  %s47, 256, %s2, [#allocation5], 128, 128, 8
    $region17: #{tpu_custom_call.1} parent=1 // pred_fallthru
      _
    // Predicated region
    $region18: #{tpu_custom_call.1} parent=1 // pred_check
      _
    $region19: #{tpu_custom_call.1} parent=1 // pred_check_branch
      %54 = sbr.rel (0) target = $region21
    $region20: #{tpu_custom_call.1} parent=1 // pred_region
      %55 = dma.done [#allocation5], 256
    $region21: #{tpu_custom_call.1} parent=1 // pred_fallthru
      _
    %56 = vsyncpa [#allocation4], 1
    %57 = vsyncpa [#allocation5], 1

</llo_original>
